<compile_context>
chip_gen: v7x
topology: tpu7x:2x2x1
jax: 0.10.0
libtpu: 0.0.40
codegen_flags: <defaults>
</compile_context>

<pallas_src>
import numpy as np

import jax
import jax.numpy as jnp
from jax.experimental import pallas as pl
from jax.experimental.pallas import tpu as pltpu


# ----------------------------- Pallas kernel --------------------------------
def _attn_gate_kernel(g_ref, x_ref, w_ref, bpsi_ref, o_ref):
    nb, cg, tp = g_ref.shape
    cl = x_ref.shape[1]
    cout = w_ref.shape[0]

    w = w_ref[...]                              # (Cout, Cg+Cl+2) packed params
    wg = w[:, :cg]                              # (Cout, Cg)   Wg^T (BN folded)
    wx = w[:, cg:cg + cl]                       # (Cout, Cl)   Wx^T (BN folded)
    b = w[:, cg + cl:cg + cl + 1]               # (Cout, 1)    bg + bx (folded)
    wpsi = w[:, cg + cl + 1:cg + cl + 2]        # (Cout, 1)    psi conv (folded)
    bpsi = bpsi_ref[0]                          # scalar psi bias (SMEM)

    tiny = (cg <= 8) and (cl <= 8) and (cout <= 8)

    for i in range(nb):                         # trace-time unroll (nb is small)
        gi = g_ref[i].astype(jnp.float32)       # (Cg, TP) pixels on lanes
        xi = x_ref[i].astype(jnp.float32)       # (Cl, TP)

        if tiny:
            # Tiny-channel path: unrolled VPU broadcast-FMAs, skips MXU latency.
            h = wg[:, 0:1] * gi[0:1, :]
            for c in range(1, cg):
                h = h + wg[:, c:c + 1] * gi[c:c + 1, :]
            for c in range(cl):
                h = h + wx[:, c:c + 1] * xi[c:c + 1, :]
            h = h + b
        else:
            # 1x1 convs (+ folded BN) as (Cout, Cin) @ (Cin, TP) on the MXU.
            h = (jnp.dot(wg, gi, preferred_element_type=jnp.float32)
                 + jnp.dot(wx, xi, preferred_element_type=jnp.float32) + b)

        h = jnp.maximum(h, 0.0)                                   # relu

        # psi: 1-output-channel 1x1 conv as a channel (sublane) reduce.
        psi = jnp.sum(h * wpsi, axis=0, keepdims=True) + bpsi     # (1, TP)
        psi = jax.nn.sigmoid(psi)

        o_ref[i] = (xi * psi).astype(o_ref.dtype)                 # gate local feats


def attention_gate_pallas(g3, x3, w_packed, bpsi, *, nb, tile_p, vmem_limit_bytes):
    """g3: (N, Cg, P), x3: (N, Cl, P); nb | N, tile_p | P. Returns (N, Cl, P)."""
    N, Cg, P = g3.shape
    _, Cl, _ = x3.shape
    assert N % nb == 0 and P % tile_p == 0

    grid = (N // nb, P // tile_p)
    return pl.pallas_call(
        _attn_gate_kernel,
        out_shape=jax.ShapeDtypeStruct((N, Cl, P), x3.dtype),
        grid_spec=pltpu.PrefetchScalarGridSpec(
            num_scalar_prefetch=0,
            grid=grid,
            in_specs=[
                pl.BlockSpec((nb, Cg, tile_p), lambda n, p: (n, 0, p)),  # g tiles
                pl.BlockSpec((nb, Cl, tile_p), lambda n, p: (n, 0, p)),  # x tiles
                pl.BlockSpec(w_packed.shape, lambda n, p: (0, 0)),       # packed params
                pl.BlockSpec(memory_space=pltpu.MemorySpace.SMEM),       # psi bias
            ],
            out_specs=pl.BlockSpec((nb, Cl, tile_p), lambda n, p: (n, 0, p)),
        ),
        compiler_params=pltpu.CompilerParams(
            dimension_semantics=("parallel", "parallel"),
            vmem_limit_bytes=int(vmem_limit_bytes)),
    )(g3, x3, w_packed, bpsi)


# --------------------------- tiling / param helpers ---------------------------
def _round_up(v, m):
    return ((v + m - 1) // m) * m


def _divisors(n):
    return [d for d in range(1, n + 1) if n % d == 0]


def _vmem_capacity_bytes():
    try:
        info = pltpu.get_tpu_info()
        for attr in ("vmem_capacity_bytes", "vmem_bytes", "vmem_size_bytes"):
            v = getattr(info, attr, None)
            if v:
                return int(v)
    except Exception:
        pass
    return 64 << 20   # conservative default (v7x-sized VMEM)


def _select_tiling(N, Cg, Cl, Cout, P, io_bytes, block_budget_bytes):
    """Pick (nb, tile_p, P128): batch-per-block, pixel tile, 128-padded pixels."""
    P128 = _round_up(P, 128)
    units = P128 // 128
    # VMEM footprint per pixel per batch element in one grid step:
    # g/x/out blocks double-buffered by the pipeline + f32 `h` temporary.
    per_px = 2 * (Cg + 2 * Cl) * io_bytes + 4 * Cout

    def fits(nb, tile_px):
        return nb * tile_px * per_px <= block_budget_bytes

    # Largest divisor of the padded pixel count that fits the budget (<= 32768 px).
    tile_units = max((d for d in _divisors(units)
                      if d <= 256 and fits(1, d * 128)), default=1)
    # v7x: keep >= 2 grid steps so both TensorCores get work (no-op on v5e/v6e).
    if N == 1 and units >= 2 and units // tile_units < 2:
        tile_units = max((d for d in _divisors(units) if d <= units // 2), default=1)
    tile_p = tile_units * 128
    n_ptiles = units // tile_units

    # Group batch elements per block when pixel tiles alone are small, to
    # amortize per-grid-step overhead; never drop below 2 total steps if >= 2
    # steps worth of work exist.
    nb = 1
    target_bytes = 1 << 20
    if N > 1:
        for d in _divisors(N):
            if not fits(d, tile_p):
                break
            if (N // d) * n_ptiles < 2 and N * n_ptiles >= 2:
                break
            nb = d
            if d * tile_p * per_px >= target_bytes:
                break
    return nb, tile_p, P128


def _fold_bn(w, b, gamma, beta, mean, var, eps=1e-5):
    """Fold an eval-mode BatchNorm into a 1x1 conv. w: (Cin, Cout), b: (Cout,)."""
    scale = gamma / jnp.sqrt(var + eps)
    return w * scale[None, :], (b - mean) * scale + beta


def init_params(key, cg, cl, cout):
    ks = jax.random.split(key, 12)
    u = lambda k, shape, s=0.5: jax.random.uniform(k, shape, jnp.float32, -s, s)
    return dict(
        wg=u(ks[0], (cg, cout)), bg=u(ks[1], (cout,)),
        wx=u(ks[2], (cl, cout)), bx=u(ks[3], (cout,)),
        wpsi=u(ks[4], (cout, 1)), bpsi=u(ks[5], (1,)),
        # BatchNorm (eval-mode) parameters / running stats
        g_gamma=1.0 + u(ks[6], (cout,), 0.1), g_beta=u(ks[7], (cout,), 0.1),
        g_mean=u(ks[8], (cout,), 0.2), g_var=0.5 + jnp.abs(u(ks[9], (cout,), 0.3)),
        x_gamma=1.0 + u(ks[10], (cout,), 0.1), x_beta=u(ks[11], (cout,), 0.1),
        x_mean=jnp.zeros((cout,)), x_var=jnp.ones((cout,)),
        p_gamma=jnp.array([1.1]), p_beta=jnp.array([0.05]),
        p_mean=jnp.array([0.02]), p_var=jnp.array([0.9]),
    )


def attention_gate_2d(g, x, params, *, io_dtype=None):
    """g: (N, Cg, H, W), x: (N, Cl, H, W) (NCHW, like PyTorch). Returns NCHW."""
    N, Cg, H, W = g.shape
    _, Cl, _, _ = x.shape
    P = H * W
    Cout = params["wg"].shape[1]

    # Fold eval-mode BN into the 1x1 convs (parameter-side, done once).
    wg_f, bg_f = _fold_bn(params["wg"], params["bg"], params["g_gamma"],
                          params["g_beta"], params["g_mean"], params["g_var"])
    wx_f, bx_f = _fold_bn(params["wx"], params["bx"], params["x_gamma"],
                          params["x_beta"], params["x_mean"], params["x_var"])
    wp_f, bp_f = _fold_bn(params["wpsi"], params["bpsi"], params["p_gamma"],
                          params["p_beta"], params["p_mean"], params["p_var"])

    # Pack all per-output-channel params into one array: [Wg^T | Wx^T | bg+bx | wpsi].
    w_packed = jnp.concatenate(
        [wg_f.T, wx_f.T, (bg_f + bx_f)[:, None], wp_f], axis=1).astype(jnp.float32)
    bpsi = bp_f.astype(jnp.float32).reshape(1)

    io_dtype = io_dtype or x.dtype
    io_bytes = np.dtype(io_dtype).itemsize

    # Channels-on-sublanes / pixels-on-lanes: NCHW -> (N, C, P) is a free reshape.
    g3 = g.reshape(N, Cg, P).astype(io_dtype)
    x3 = x.reshape(N, Cl, P).astype(io_dtype)

    # VMEM-budgeted, generation-aware tile selection.
    vmem_limit = min(_vmem_capacity_bytes() // 2, 64 << 20)
    nb, tile_p, P128 = _select_tiling(N, Cg, Cl, Cout, P, io_bytes, vmem_limit // 2)

    if P128 != P:  # pad only to the lane width (<= 127 extra columns)
        g3 = jnp.pad(g3, ((0, 0), (0, 0), (0, P128 - P)))
        x3 = jnp.pad(x3, ((0, 0), (0, 0), (0, P128 - P)))

    out3 = attention_gate_pallas(g3, x3, w_packed, bpsi, nb=nb, tile_p=tile_p,
                                 vmem_limit_bytes=vmem_limit)

    if P128 != P:
        out3 = out3[:, :, :P]
    return out3.reshape(N, Cl, H, W)


def attention_gate_2d_ref(g, x, params, eps=1e-5):
    """Pure-JAX reference (same eval-mode BN semantics)."""
    def conv1x1(t, w, b):  # t: NCHW, w: (Cin, Cout)
        return jnp.einsum("nchw,co->nohw", t, w) + b[None, :, None, None]

    def bn(t, gamma, beta, mean, var):
        return (t - mean[None, :, None, None]) / jnp.sqrt(var + eps)[None, :, None, None] \
               * gamma[None, :, None, None] + beta[None, :, None, None]

    g1 = bn(conv1x1(g, params["wg"], params["bg"]),
            params["g_gamma"], params["g_beta"], params["g_mean"], params["g_var"])
    x1 = bn(conv1x1(x, params["wx"], params["bx"]),
            params["x_gamma"], params["x_beta"], params["x_mean"], params["x_var"])
    h = jax.nn.relu(g1 + x1)
    psi = bn(conv1x1(h, params["wpsi"], params["bpsi"]),
             params["p_gamma"], params["p_beta"], params["p_mean"], params["p_var"])
    return x * jax.nn.sigmoid(psi)


# --------------------------------- main --------------------------------------
if __name__ == "__main__":
    key = jax.random.PRNGKey(0)
    k_g, k_x, k_p = jax.random.split(key, 3)

    N, Cg, Cl, Cout, H, W = 2, 4, 4, 8, 16, 16
    g = jax.random.normal(k_g, (N, Cg, H, W), jnp.float32)
    x = jax.random.normal(k_x, (N, Cl, H, W), jnp.float32)
    params = init_params(k_p, Cg, Cl, Cout)

    ref = attention_gate_2d_ref(g, x, params)

    # f32 I/O path
    out = jax.block_until_ready(attention_gate_2d(g, x, params))
    assert out.shape == (N, Cl, H, W)
    assert jnp.allclose(out, ref, atol=2e-5, rtol=2e-5), "f32 mismatch vs reference"

    # bf16 I/O path (HBM-bandwidth lever); in-kernel math stays f32.
    out_bf16 = jax.block_until_ready(
        attention_gate_2d(g, x, params, io_dtype=jnp.bfloat16))
    assert out_bf16.dtype == jnp.bfloat16
    assert jnp.allclose(out_bf16.astype(jnp.float32), ref, atol=1e-1), \
        "bf16 mismatch vs reference"

    print("KERNEL_OK")
</pallas_src>

<mosaic_0001>
module attributes {stable_mosaic.version = 11 : i64} {
  func.func @_attn_gate_kernel(%arg0: i32, %arg1: i32, %arg2: memref<1x4x256xf32, #tpu.memory_space<vmem>>, %arg3: memref<1x4x256xf32, #tpu.memory_space<vmem>>, %arg4: memref<8x10xf32, #tpu.memory_space<vmem>>, %arg5: memref<1xf32, #tpu.memory_space<smem>>, %arg6: memref<1x4x256xf32, #tpu.memory_space<vmem>>) attributes {dimension_semantics = [#tpu.dimension_semantics<parallel>, #tpu.dimension_semantics<parallel>], iteration_bounds = array<i64: 2, 1>, scalar_prefetch = 0 : i64, scratch_operands = 0 : i64, tpu.core_type = #tpu.core_type<tc>, window_params = [{transform_indices = @transform_0, window_bounds = array<i64: 1, 4, 256>}, {transform_indices = @transform_1, window_bounds = array<i64: 1, 4, 256>}, {pipeline_mode = #tpu.pipeline_mode<synchronous>, transform_indices = @transform_2, window_bounds = array<i64: 8, 10>}, {transform_indices = @transform_3, window_bounds = array<i64: 1>}, {transform_indices = @transform_4, window_bounds = array<i64: 1, 4, 256>}]} {
    %c0 = arith.constant 0 : index
    %c0_0 = arith.constant 0 : index
    %0 = vector.load %arg4[%c0, %c0_0] : memref<8x10xf32, #tpu.memory_space<vmem>>, vector<8x10xf32>
    %1 = vector.extract_strided_slice %0 {offsets = [0, 0], sizes = [8, 4], strides = [1, 1]} : vector<8x10xf32> to vector<8x4xf32>
    %2 = vector.extract_strided_slice %0 {offsets = [0, 4], sizes = [8, 4], strides = [1, 1]} : vector<8x10xf32> to vector<8x4xf32>
    %3 = vector.extract_strided_slice %0 {offsets = [0, 8], sizes = [8, 1], strides = [1, 1]} : vector<8x10xf32> to vector<8x1xf32>
    %4 = vector.extract_strided_slice %0 {offsets = [0, 9], sizes = [8, 1], strides = [1, 1]} : vector<8x10xf32> to vector<8x1xf32>
    %c0_1 = arith.constant 0 : index
    %5 = memref.load %arg5[%c0_1] : memref<1xf32, #tpu.memory_space<smem>>
    %c0_2 = arith.constant 0 : index
    %c0_3 = arith.constant 0 : index
    %c0_4 = arith.constant 0 : index
    %6 = vector.load %arg2[%c0_2, %c0_3, %c0_4] : memref<1x4x256xf32, #tpu.memory_space<vmem>>, vector<1x4x256xf32>
    %7 = vector.shape_cast %6 : vector<1x4x256xf32> to vector<4x256xf32>
    %c0_5 = arith.constant 0 : index
    %c0_6 = arith.constant 0 : index
    %c0_7 = arith.constant 0 : index
    %8 = vector.load %arg3[%c0_5, %c0_6, %c0_7] : memref<1x4x256xf32, #tpu.memory_space<vmem>>, vector<1x4x256xf32>
    %9 = vector.shape_cast %8 : vector<1x4x256xf32> to vector<4x256xf32>
    %10 = vector.extract_strided_slice %1 {offsets = [0, 0], sizes = [8, 1], strides = [1, 1]} : vector<8x4xf32> to vector<8x1xf32>
    %11 = vector.extract_strided_slice %7 {offsets = [0, 0], sizes = [1, 256], strides = [1, 1]} : vector<4x256xf32> to vector<1x256xf32>
    %12 = vector.broadcast %10 : vector<8x1xf32> to vector<8x256xf32>
    %13 = vector.broadcast %11 : vector<1x256xf32> to vector<8x256xf32>
    %14 = arith.mulf %12, %13 : vector<8x256xf32>
    %15 = vector.extract_strided_slice %1 {offsets = [0, 1], sizes = [8, 1], strides = [1, 1]} : vector<8x4xf32> to vector<8x1xf32>
    %16 = vector.extract_strided_slice %7 {offsets = [1, 0], sizes = [1, 256], strides = [1, 1]} : vector<4x256xf32> to vector<1x256xf32>
    %17 = vector.broadcast %15 : vector<8x1xf32> to vector<8x256xf32>
    %18 = vector.broadcast %16 : vector<1x256xf32> to vector<8x256xf32>
    %19 = arith.mulf %17, %18 : vector<8x256xf32>
    %20 = arith.addf %14, %19 : vector<8x256xf32>
    %21 = vector.extract_strided_slice %1 {offsets = [0, 2], sizes = [8, 1], strides = [1, 1]} : vector<8x4xf32> to vector<8x1xf32>
    %22 = vector.extract_strided_slice %7 {offsets = [2, 0], sizes = [1, 256], strides = [1, 1]} : vector<4x256xf32> to vector<1x256xf32>
    %23 = vector.broadcast %21 : vector<8x1xf32> to vector<8x256xf32>
    %24 = vector.broadcast %22 : vector<1x256xf32> to vector<8x256xf32>
    %25 = arith.mulf %23, %24 : vector<8x256xf32>
    %26 = arith.addf %20, %25 : vector<8x256xf32>
    %27 = vector.extract_strided_slice %1 {offsets = [0, 3], sizes = [8, 1], strides = [1, 1]} : vector<8x4xf32> to vector<8x1xf32>
    %28 = vector.extract_strided_slice %7 {offsets = [3, 0], sizes = [1, 256], strides = [1, 1]} : vector<4x256xf32> to vector<1x256xf32>
    %29 = vector.broadcast %27 : vector<8x1xf32> to vector<8x256xf32>
    %30 = vector.broadcast %28 : vector<1x256xf32> to vector<8x256xf32>
    %31 = arith.mulf %29, %30 : vector<8x256xf32>
    %32 = arith.addf %26, %31 : vector<8x256xf32>
    %33 = vector.extract_strided_slice %2 {offsets = [0, 0], sizes = [8, 1], strides = [1, 1]} : vector<8x4xf32> to vector<8x1xf32>
    %34 = vector.extract_strided_slice %9 {offsets = [0, 0], sizes = [1, 256], strides = [1, 1]} : vector<4x256xf32> to vector<1x256xf32>
    %35 = vector.broadcast %33 : vector<8x1xf32> to vector<8x256xf32>
    %36 = vector.broadcast %34 : vector<1x256xf32> to vector<8x256xf32>
    %37 = arith.mulf %35, %36 : vector<8x256xf32>
    %38 = arith.addf %32, %37 : vector<8x256xf32>
    %39 = vector.extract_strided_slice %2 {offsets = [0, 1], sizes = [8, 1], strides = [1, 1]} : vector<8x4xf32> to vector<8x1xf32>
    %40 = vector.extract_strided_slice %9 {offsets = [1, 0], sizes = [1, 256], strides = [1, 1]} : vector<4x256xf32> to vector<1x256xf32>
    %41 = vector.broadcast %39 : vector<8x1xf32> to vector<8x256xf32>
    %42 = vector.broadcast %40 : vector<1x256xf32> to vector<8x256xf32>
    %43 = arith.mulf %41, %42 : vector<8x256xf32>
    %44 = arith.addf %38, %43 : vector<8x256xf32>
    %45 = vector.extract_strided_slice %2 {offsets = [0, 2], sizes = [8, 1], strides = [1, 1]} : vector<8x4xf32> to vector<8x1xf32>
    %46 = vector.extract_strided_slice %9 {offsets = [2, 0], sizes = [1, 256], strides = [1, 1]} : vector<4x256xf32> to vector<1x256xf32>
    %47 = vector.broadcast %45 : vector<8x1xf32> to vector<8x256xf32>
    %48 = vector.broadcast %46 : vector<1x256xf32> to vector<8x256xf32>
    %49 = arith.mulf %47, %48 : vector<8x256xf32>
    %50 = arith.addf %44, %49 : vector<8x256xf32>
    %51 = vector.extract_strided_slice %2 {offsets = [0, 3], sizes = [8, 1], strides = [1, 1]} : vector<8x4xf32> to vector<8x1xf32>
    %52 = vector.extract_strided_slice %9 {offsets = [3, 0], sizes = [1, 256], strides = [1, 1]} : vector<4x256xf32> to vector<1x256xf32>
    %53 = vector.broadcast %51 : vector<8x1xf32> to vector<8x256xf32>
    %54 = vector.broadcast %52 : vector<1x256xf32> to vector<8x256xf32>
    %55 = arith.mulf %53, %54 : vector<8x256xf32>
    %56 = arith.addf %50, %55 : vector<8x256xf32>
    %57 = vector.broadcast %3 : vector<8x1xf32> to vector<8x256xf32>
    %58 = arith.addf %56, %57 : vector<8x256xf32>
    %cst = arith.constant 0.000000e+00 : f32
    %59 = vector.broadcast %cst : f32 to vector<8x256xf32>
    %60 = arith.maximumf %58, %59 : vector<8x256xf32>
    %61 = vector.broadcast %4 : vector<8x1xf32> to vector<8x256xf32>
    %62 = arith.mulf %60, %61 : vector<8x256xf32>
    %cst_8 = arith.constant dense<0.000000e+00> : vector<256xf32>
    %63 = vector.multi_reduction <add>, %62, %cst_8 [0] : vector<8x256xf32> to vector<256xf32>
    %64 = vector.shape_cast %63 : vector<256xf32> to vector<1x256xf32>
    %65 = vector.broadcast %5 : f32 to vector<1x256xf32>
    %66 = arith.addf %64, %65 : vector<1x256xf32>
    %67 = arith.negf %66 : vector<1x256xf32>
    %68 = math.exp %67 : vector<1x256xf32>
    %cst_9 = arith.constant 1.000000e+00 : f32
    %69 = vector.broadcast %cst_9 : f32 to vector<1x256xf32>
    %70 = arith.addf %69, %68 : vector<1x256xf32>
    %71 = arith.divf %69, %70 : vector<1x256xf32>
    %72 = vector.broadcast %71 : vector<1x256xf32> to vector<4x256xf32>
    %73 = arith.mulf %9, %72 : vector<4x256xf32>
    %c0_10 = arith.constant 0 : index
    %c0_11 = arith.constant 0 : index
    %c0_12 = arith.constant 0 : index
    %74 = vector.load %arg6[%c0_10, %c0_11, %c0_12] : memref<1x4x256xf32, #tpu.memory_space<vmem>>, vector<1x4x256xf32>
    %75 = vector.shape_cast %74 : vector<1x4x256xf32> to vector<4x256xf32>
    %76 = vector.shape_cast %73 : vector<4x256xf32> to vector<1x4x256xf32>
    tpu.vector_store %arg6[%c0_10, %c0_11, %c0_12], %76 {strides = array<i32>} : memref<1x4x256xf32, #tpu.memory_space<vmem>>, vector<1x4x256xf32>,
    return
  }
  func.func @transform_0(%arg0: i32, %arg1: i32) -> (i32, i32, i32) {
    %c0_i32 = arith.constant 0 : i32
    %c0_i32_0 = arith.constant 0 : i32
    return %arg0, %c0_i32, %arg1 : i32, i32, i32
  }
  func.func @transform_1(%arg0: i32, %arg1: i32) -> (i32, i32, i32) {
    %c0_i32 = arith.constant 0 : i32
    %c0_i32_0 = arith.constant 0 : i32
    return %arg0, %c0_i32, %arg1 : i32, i32, i32
  }
  func.func @transform_2(%arg0: i32, %arg1: i32) -> (i32, i32) {
    %c0_i32 = arith.constant 0 : i32
    %c0_i32_0 = arith.constant 0 : i32
    %c0_i32_1 = arith.constant 0 : i32
    return %c0_i32, %c0_i32_0 : i32, i32
  }
  func.func @transform_3(%arg0: i32, %arg1: i32) -> i32 {
    %c0_i32 = arith.constant 0 : i32
    %c0_i32_0 = arith.constant 0 : i32
    return %c0_i32 : i32
  }
  func.func @transform_4(%arg0: i32, %arg1: i32) -> (i32, i32, i32) {
    %c0_i32 = arith.constant 0 : i32
    %c0_i32_0 = arith.constant 0 : i32
    return %arg0, %c0_i32, %arg1 : i32, i32, i32
  }
}

</mosaic_0001>

<llo_original>
// kernel: tpu_custom_call.1
$region0: #{tpu_custom_call.1}
  #allocation0 [shape = 'u32[]', space=smem, size = 0x4, offset = 0x4, fixed_abs, tag = 'smem constant byte address 0x4 - core index']
  #allocation1 [shape = 'u32[144,128]{1,0:T(1,128)}', space=vmem, size = 0x12000, scoped, tag = 'internal scratch']
  #allocation2 [shape = 'f32[1]{0:T(128)S(6)}', space=smem, size = 0x200, scoped, tag = 'scoped memory for tpu_custom_call.1']
  %s0 = inlined_call_operand.hbm [shape: f32[2,4,256], index: 0, kind: input, shape index: {}]
  %s1 = inlined_call_operand.hbm [shape: f32[2,4,256], index: 1, kind: input, shape index: {}]
  %s2 = inlined_call_operand.vmem [shape: f32[8,10], index: 2, kind: input, shape index: {}]
  %s3 = inlined_call_operand.<no memory space> [shape: f32[1], index: 3, kind: input, shape index: {}]
  %s4 = inlined_call_operand.hbm [shape: f32[2,4,256], index: 4, kind: output, shape index: {}]
  %s5 = sld [smem:[#allocation0]]
  $region57: #{tpu_custom_call.1} parent=0
    _
  %s7 = ssub.s32 1, %s5
  %s8 = scalar_select 0, %s7, %s5
  %9 = sst [smem:[#allocation2]] %s3
  $region1: #{tpu_custom_call.1} parent=0
    #allocation3 [shape = 'u8[8192]{0}', space=vmem, size = 0x2000, scoped, tag = 'input window, operand 0']
    #allocation4 [shape = 's32[2]{0}', space=sflag, size = 0x8, scoped, tag = 'scoped memory for tpu_custom_call.1']
    #allocation5 [shape = 's32[2]{0}', space=sflag, size = 0x8, scoped, tag = 'scoped memory for tpu_custom_call.1']
    #allocation6 [shape = 'u8[8192]{0}', space=vmem, size = 0x2000, scoped, tag = 'input window, operand 1']
    #allocation7 [shape = 's32[2]{0}', space=sflag, size = 0x8, scoped, tag = 'scoped memory for tpu_custom_call.1']
    #allocation8 [shape = 'u8[8192]{0}', space=vmem, size = 0x2000, scoped, tag = 'output window, operand 0']
    %10 = vsyncpa [#allocation4], 0
    %s11 = scalar_lea.sflag [#allocation4], 1
    %12 = vsyncpa %s11, 0
    %13 = vsyncpa [#allocation7], 0
    %s14 = scalar_lea.sflag [#allocation7], 1
    %15 = vsyncpa %s14, 0
    %16 = vsyncpa [#allocation5], 0
    %s17 = scalar_lea.sflag [#allocation5], 1
    %18 = vsyncpa %s17, 0
    loop: start=0, step=1, limit=4
    $region2: #{tpu_custom_call.1} parent=1 // loop_pre_header
      _
    $region3: #{tpu_custom_call.1} parent=1 // loop_header
      %s20 = sphi 0, %s24
      %p21 = scmp.ge.s32.totalorder %s20, 4
      %s27 = sphi 0, %s39
      %s28 = sphi 0, %s35
      %s29 = sphi 0, %s27
      %s30 = sphi 0, %s28
      %s31 = sphi 0, %s29
      %s32 = sphi 0, %s30
      %s44 = sphi 0, %s46
      %s47 = sphi 0, %s44
      %s48 = sphi 0, %s47
      %s64 = sphi 0, %s48
      %s72 = sphi 0, %s74
      %s75 = sphi 0, %s72
      %s76 = sphi 0, %s75
      %s92 = sphi 0, %s76
      %s96 = sphi 0, %s96
      %s98 = sphi 0, %s96
      %s99 = sphi 0, %s98
      %s113 = sphi 0, %s99
      %s117 = sphi 0, %s117
      %s119 = sphi 0, %s117
      %s120 = sphi 0, %s119
      %s134 = sphi 0, %s120
      %s142 = sphi 0, %s144
      %s145 = sphi 0, %s142
      %s146 = sphi 0, %s145
      %s162 = sphi 0, %s146
    $region4: #{tpu_custom_call.1} parent=1 // loop_header_branch
      %23 = sbr.rel (%p21) target = $region8
    $region5: #{tpu_custom_call.1} parent=1 // loop_body
      %s25 = ssub.s32 %s20, 1
      %s26 = ssub.s32 %s20, 2
      %s33 = sadd.s32 1, %s28
      %p34 = scmp.ge.s32.totalorder %s33, 1
      %s35 = scalar_select %p34, 0, %s33
      %s36 = sadd.s32 1, %s27
      %s37 = scalar_select %p34, %s36, %s27
      %p38 = scmp.ge.s32.totalorder %s37, 2
      %s39 = scalar_select %p38, 0, %s37
      %s40 = ssub.s32 %s27, %s39
      %s41 = ssub.s32 %s28, %s35
      %s42 = sor.u32 %s40, %s41
      %p43 = scmp.eq.s32.totalorder %s42, 0
      %s45 = sadd.s32 %s44, 1
      %s46 = scalar_select %p43, %s44, %s45
      %p49 = pneg %p43
      %p50 = scmp.eq.s32.totalorder %s20, 1
      %p51 = por %p49, %p50
      %p52 = scmp.ne.s32.totalorder %s44, %s47
      %p53 = scmp.eq.s32.totalorder %s20, 0
      %p54 = por %p52, %p53
      %p55 = scmp.ne.s32.totalorder %s44, %s47
      %p56 = scmp.eq.s32.totalorder %s25, 1
      %p57 = por %p55, %p56
      %p58 = scmp.ne.s32.totalorder %s47, %s48
      %p59 = scmp.eq.s32.totalorder %s25, 0
      %p60 = por %p58, %p59
      %p61 = scmp.ne.s32.totalorder %s47, %s48
      %p62 = scmp.eq.s32.totalorder %s26, 1
      %p63 = por %p61, %p62
      %p65 = scmp.ne.s32.totalorder %s48, %s64
      %p66 = scmp.eq.s32.totalorder %s26, 0
      %p67 = por %p65, %p66
      %s68 = ssub.s32 %s27, %s39
      %s69 = ssub.s32 %s28, %s35
      %s70 = sor.u32 %s68, %s69
      %p71 = scmp.eq.s32.totalorder %s70, 0
      %s73 = sadd.s32 %s72, 1
      %s74 = scalar_select %p71, %s72, %s73
      %p77 = pneg %p71
      %p78 = scmp.eq.s32.totalorder %s20, 1
      %p79 = por %p77, %p78
      %p80 = scmp.ne.s32.totalorder %s72, %s75
      %p81 = scmp.eq.s32.totalorder %s20, 0
      %p82 = por %p80, %p81
      %p83 = scmp.ne.s32.totalorder %s72, %s75
      %p84 = scmp.eq.s32.totalorder %s25, 1
      %p85 = por %p83, %p84
      %p86 = scmp.ne.s32.totalorder %s75, %s76
      %p87 = scmp.eq.s32.totalorder %s25, 0
      %p88 = por %p86, %p87
      %p89 = scmp.ne.s32.totalorder %s75, %s76
      %p90 = scmp.eq.s32.totalorder %s26, 1
      %p91 = por %p89, %p90
      %p93 = scmp.ne.s32.totalorder %s76, %s92
      %p94 = scmp.eq.s32.totalorder %s26, 0
      %p95 = por %p93, %p94
      %s97 = sadd.s32 %s96, 1
      %p100 = scmp.eq.s32.totalorder %s20, 1
      %p101 = scmp.ne.s32.totalorder %s96, %s98
      %p102 = scmp.eq.s32.totalorder %s20, 0
      %p103 = por %p101, %p102
      %p104 = scmp.ne.s32.totalorder %s96, %s98
      %p105 = scmp.eq.s32.totalorder %s25, 1
      %p106 = por %p104, %p105
      %p107 = scmp.ne.s32.totalorder %s98, %s99
      %p108 = scmp.eq.s32.totalorder %s25, 0
      %p109 = por %p107, %p108
      %p110 = scmp.ne.s32.totalorder %s98, %s99
      %p111 = scmp.eq.s32.totalorder %s26, 1
      %p112 = por %p110, %p111
      %p114 = scmp.ne.s32.totalorder %s99, %s113
      %p115 = scmp.eq.s32.totalorder %s26, 0
      %p116 = por %p114, %p115
      %s118 = sadd.s32 %s117, 1
      %p121 = scmp.eq.s32.totalorder %s20, 1
      %p122 = scmp.ne.s32.totalorder %s117, %s119
      %p123 = scmp.eq.s32.totalorder %s20, 0
      %p124 = por %p122, %p123
      %p125 = scmp.ne.s32.totalorder %s117, %s119
      %p126 = scmp.eq.s32.totalorder %s25, 1
      %p127 = por %p125, %p126
      %p128 = scmp.ne.s32.totalorder %s119, %s120
      %p129 = scmp.eq.s32.totalorder %s25, 0
      %p130 = por %p128, %p129
      %p131 = scmp.ne.s32.totalorder %s119, %s120
      %p132 = scmp.eq.s32.totalorder %s26, 1
      %p133 = por %p131, %p132
      %p135 = scmp.ne.s32.totalorder %s120, %s134
      %p136 = scmp.eq.s32.totalorder %s26, 0
      %p137 = por %p135, %p136
      %s138 = ssub.s32 %s27, %s39
      %s139 = ssub.s32 %s28, %s35
      %s140 = sor.u32 %s138, %s139
      %p141 = scmp.eq.s32.totalorder %s140, 0
      %s143 = sadd.s32 %s142, 1
      %s144 = scalar_select %p141, %s142, %s143
      %p147 = pneg %p141
      %p148 = scmp.eq.s32.totalorder %s20, 1
      %p149 = por %p147, %p148
      %p150 = scmp.ne.s32.totalorder %s142, %s145
      %p151 = scmp.eq.s32.totalorder %s20, 0
      %p152 = por %p150, %p151
      %p153 = scmp.ne.s32.totalorder %s142, %s145
      %p154 = scmp.eq.s32.totalorder %s25, 1
      %p155 = por %p153, %p154
      %p156 = scmp.ne.s32.totalorder %s145, %s146
      %p157 = scmp.eq.s32.totalorder %s25, 0
      %p158 = por %p156, %p157
      %p159 = scmp.ne.s32.totalorder %s145, %s146
      %p160 = scmp.eq.s32.totalorder %s26, 1
      %p161 = por %p159, %p160
      %p163 = scmp.ne.s32.totalorder %s146, %s162
      %p164 = scmp.eq.s32.totalorder %s26, 0
      %p165 = por %p163, %p164
      %p166 = scmp.le.s32.totalorder 1, %s20
      %p167 = scmp.lt.s32.totalorder %s20, 3
      %p168 = pnand %p166, %p167
      %p169 = pneg %p168
      // Predicated region
      $region9: #{tpu_custom_call.1} parent=5 // pred_check
        _
      $region10: #{tpu_custom_call.1} parent=5 // pred_check_branch
        %171 = sbr.rel (%p168) target = $region12
      $region11: #{tpu_custom_call.1} parent=5 // pred_region
        %s172 = ssub.s32 %s20, 1
        // Predicated region
        $region13: #{tpu_custom_call.1} parent=11 // pred_check
          %p173 = pneg %p109
        $region14: #{tpu_custom_call.1} parent=11 // pred_check_branch
          %175 = sbr.rel (%p173) target = $region16
        $region15: #{tpu_custom_call.1} parent=11 // pred_region
          _
        $region16: #{tpu_custom_call.1} parent=11 // pred_fallthru
          _
        // Predicated region
        $region17: #{tpu_custom_call.1} parent=11 // pred_check
          %p176 = pneg %p130
        $region18: #{tpu_custom_call.1} parent=11 // pred_check_branch
          %178 = sbr.rel (%p176) target = $region20
        $region19: #{tpu_custom_call.1} parent=11 // pred_region
          _
        $region20: #{tpu_custom_call.1} parent=11 // pred_fallthru
          _
      $region12: #{tpu_custom_call.1} parent=5 // pred_fallthru
        _
      %p179 = scmp.lt.s32.totalorder %s20, 2
      // Predicated region
      $region21: #{tpu_custom_call.1} parent=5 // pred_check
        %p180 = pneg %p179
      $region22: #{tpu_custom_call.1} parent=5 // pred_check_branch
        %182 = sbr.rel (%p180) target = $region24
      $region23: #{tpu_custom_call.1} parent=5 // pred_region
        // Predicated region
        $region25: #{tpu_custom_call.1} parent=23 // pred_check
          %p183 = pneg %p54
        $region26: #{tpu_custom_call.1} parent=23 // pred_check_branch
          %185 = sbr.rel (%p183) target = $region28
        $region27: #{tpu_custom_call.1} parent=23 // pred_region
          %s186 = sand.u32 %s44, 1
          %s187 = scalar_lea.sflag [#allocation4], %s186
          %s188 = sand.u32 %s44, 1
          %s189 = smul.addr %s188, 8
          %s190 = scalar_lea.vmem [#allocation3], %s189
          %s191 = smul.u32 2, %s28
          %s193 = ssub.s32 128, 128
          %194 = vsyncadd %s187, %s193
          %s195 = smul.addr %s27, 2
          %s196 = sadd.s32 %s191, %s195
          %s197 = smul.addr %s196, 64
          %s198 = scalar_lea.hbm %s0, %s197
          %s200 = sshll.u32 %s190, 4
          %s201 = int_to_ptr.vmem [resolvable:$true] %s200
          %203 = dma.hbm_to_vmem [thread:$0]  %s198, 128, %s201, %s187
        $region28: #{tpu_custom_call.1} parent=23 // pred_fallthru
          _
        // Predicated region
        $region29: #{tpu_custom_call.1} parent=23 // pred_check
          %p204 = pneg %p82
        $region30: #{tpu_custom_call.1} parent=23 // pred_check_branch
          %206 = sbr.rel (%p204) target = $region32
        $region31: #{tpu_custom_call.1} parent=23 // pred_region
          %s207 = sand.u32 %s72, 1
          %s208 = scalar_lea.sflag [#allocation7], %s207
          %s209 = sand.u32 %s72, 1
          %s210 = smul.addr %s209, 8
          %s211 = scalar_lea.vmem [#allocation6], %s210
          %s212 = smul.u32 2, %s28
          %s214 = ssub.s32 128, 128
          %215 = vsyncadd %s208, %s214
          %s216 = smul.addr %s27, 2
          %s217 = sadd.s32 %s212, %s216
          %s218 = smul.addr %s217, 64
          %s219 = scalar_lea.hbm %s1, %s218
          %s221 = sshll.u32 %s211, 4
          %s222 = int_to_ptr.vmem [resolvable:$true] %s221
          %224 = dma.hbm_to_vmem [thread:$0]  %s219, 128, %s222, %s208
        $region32: #{tpu_custom_call.1} parent=23 // pred_fallthru
          _
      $region24: #{tpu_custom_call.1} parent=5 // pred_fallthru
        _
      %p225 = scmp.le.s32.totalorder 1, %s20
      %p226 = scmp.lt.s32.totalorder %s20, 3
      %p227 = pnand %p225, %p226
      %p228 = pneg %p227
      // Predicated region
      $region33: #{tpu_custom_call.1} parent=5 // pred_check
        _
      $region34: #{tpu_custom_call.1} parent=5 // pred_check_branch
        %230 = sbr.rel (%p227) target = $region36
      $region35: #{tpu_custom_call.1} parent=5 // pred_region
        %s231 = ssub.s32 %s20, 1
        %s232 = sand.u32 %s47, 1
        %s233 = scalar_lea.sflag [#allocation4], %s232
        %s234 = sand.u32 %s47, 1
        %s235 = smul.addr %s234, 8
        %s236 = scalar_lea.vmem [#allocation3], %s235
        // Predicated region
        $region37: #{tpu_custom_call.1} parent=35 // pred_check
          %p237 = pneg %p60
        $region38: #{tpu_custom_call.1} parent=35 // pred_check_branch
          %239 = sbr.rel (%p237) target = $region40
        $region39: #{tpu_custom_call.1} parent=35 // pred_region
          %240 = dma.done %s233, 128
        $region40: #{tpu_custom_call.1} parent=35 // pred_fallthru
          _
        %s241 = sand.u32 %s75, 1
        %s242 = scalar_lea.sflag [#allocation7], %s241
        %s243 = sand.u32 %s75, 1
        %s244 = smul.addr %s243, 8
        %s245 = scalar_lea.vmem [#allocation6], %s244
        // Predicated region
        $region41: #{tpu_custom_call.1} parent=35 // pred_check
          %p246 = pneg %p88
        $region42: #{tpu_custom_call.1} parent=35 // pred_check_branch
          %248 = sbr.rel (%p246) target = $region44
        $region43: #{tpu_custom_call.1} parent=35 // pred_region
          %249 = dma.done %s242, 128
        $region44: #{tpu_custom_call.1} parent=35 // pred_fallthru
          _
        %s250 = sand.u32 %s47, 1
        %s251 = scalar_lea.sflag [#allocation4], %s250
        %s252 = sand.u32 %s47, 1
        %s253 = smul.addr %s252, 8
        %s254 = scalar_lea.vmem [#allocation3], %s253
        %p255 = pneg %p60
        %p256 = pneg %p57
        %s257 = sand.u32 %s75, 1
        %s258 = scalar_lea.sflag [#allocation7], %s257
        %s259 = sand.u32 %s75, 1
        %s260 = smul.addr %s259, 8
        %s261 = scalar_lea.vmem [#allocation6], %s260
        %p262 = pneg %p88
        %p263 = pneg %p85
        %p264 = pneg %p109
        %p265 = pneg %p106
        %p266 = pneg %p130
        %p267 = pneg %p127
        %p268 = pneg %p158
        %p269 = pneg %p155
        %s270 = sand.u32 %s145, 1
        %s271 = scalar_lea.sflag [#allocation5], %s270
        %s272 = sand.u32 %s145, 1
        %s273 = smul.addr %s272, 8
        %s274 = scalar_lea.vmem [#allocation8], %s273
        %s275 = smul.u32 2, %s30
        %s276 = smul.u32 2, %s30
        %s277 = smul.u32 2, %s30
        %v278 = vld [vmem:[%s2] sm:$0xff]
        %s279 = sld [smem:[#allocation2]]
        %v280 = vld [vmem:[%s236] sm:$0xff]
        %v281 = vld [vmem:[%s245] sm:$0xff]
        %283 = vset.pattern.permute.xlu0 0
        %284 = vperm.xlu0 %283, %v278
        %v285 = vpop.permute.xlu0 %284
        %v288 = vlaneseq
        %v289 = vshrl.u32 %v288, 7
        %v290 = vsub.s32 0, %v289
        %v291 = vrot.slane %v280, %v290
        %v292 = vlaneseq
        %v293 = vshrl.u32 %v292, 7
        %v294 = vsub.s32 4, %v293
        %v295 = vrot.slane %v280, %v294
        %v298 = vlaneseq
        %v299 = vshrl.u32 %v298, 7
        %v300 = vsub.s32 0, %v299
        %v301 = vrot.slane %v291, %v300
        %v302 = vlaneseq
        %v303 = vshrl.u32 %v302, 7
        %v304 = vsub.s32 0, %v303
        %v305 = vrot.slane %v295, %v304
        %v306 = vmul.f32 %v285, %v301
        %v307 = vmul.f32 %v285, %v305
        %308 = vset.pattern.permute.xlu0 1
        %309 = vperm.xlu0 %308, %v278
        %v310 = vpop.permute.xlu0 %309
        %v312 = vlaneseq
        %v313 = vshrl.u32 %v312, 7
        %v314 = vsub.s32 1, %v313
        %v315 = vrot.slane %v280, %v314
        %v316 = vlaneseq
        %v317 = vshrl.u32 %v316, 7
        %v318 = vsub.s32 5, %v317
        %v319 = vrot.slane %v280, %v318
        %v322 = vlaneseq
        %v323 = vshrl.u32 %v322, 7
        %v324 = vsub.s32 1, %v323
        %v325 = vrot.slane %v315, %v324
        %v326 = vlaneseq
        %v327 = vshrl.u32 %v326, 7
        %v328 = vsub.s32 1, %v327
        %v329 = vrot.slane %v319, %v328
        %v330 = vmul.f32 %v310, %v325
        %v331 = vmul.f32 %v310, %v329
        %v332 = vadd.f32 %v306, %v330
        %v333 = vadd.f32 %v307, %v331
        %334 = vset.pattern.permute.xlu0 2
        %335 = vperm.xlu0 %334, %v278
        %v336 = vpop.permute.xlu0 %335
        %v338 = vlaneseq
        %v339 = vshrl.u32 %v338, 7
        %v340 = vsub.s32 2, %v339
        %v341 = vrot.slane %v280, %v340
        %v342 = vlaneseq
        %v343 = vshrl.u32 %v342, 7
        %v344 = vsub.s32 6, %v343
        %v345 = vrot.slane %v280, %v344
        %v348 = vlaneseq
        %v349 = vshrl.u32 %v348, 7
        %v350 = vsub.s32 2, %v349
        %v351 = vrot.slane %v341, %v350
        %v352 = vlaneseq
        %v353 = vshrl.u32 %v352, 7
        %v354 = vsub.s32 2, %v353
        %v355 = vrot.slane %v345, %v354
        %v356 = vmul.f32 %v336, %v351
        %v357 = vmul.f32 %v336, %v355
        %v358 = vadd.f32 %v332, %v356
        %v359 = vadd.f32 %v333, %v357
        %360 = vset.pattern.permute.xlu0 3
        %361 = vperm.xlu0 %360, %v278
        %v362 = vpop.permute.xlu0 %361
        %v364 = vlaneseq
        %v365 = vshrl.u32 %v364, 7
        %v366 = vsub.s32 3, %v365
        %v367 = vrot.slane %v280, %v366
        %v368 = vlaneseq
        %v369 = vshrl.u32 %v368, 7
        %v370 = vsub.s32 7, %v369
        %v371 = vrot.slane %v280, %v370
        %v374 = vlaneseq
        %v375 = vshrl.u32 %v374, 7
        %v376 = vsub.s32 3, %v375
        %v377 = vrot.slane %v367, %v376
        %v378 = vlaneseq
        %v379 = vshrl.u32 %v378, 7
        %v380 = vsub.s32 3, %v379
        %v381 = vrot.slane %v371, %v380
        %v382 = vmul.f32 %v362, %v377
        %v383 = vmul.f32 %v362, %v381
        %v384 = vadd.f32 %v358, %v382
        %v385 = vadd.f32 %v359, %v383
        %386 = vset.pattern.permute.xlu0 4
        %387 = vperm.xlu0 %386, %v278
        %v388 = vpop.permute.xlu0 %387
        %v391 = vlaneseq
        %v392 = vshrl.u32 %v391, 7
        %v393 = vsub.s32 0, %v392
        %v394 = vrot.slane %v281, %v393
        %v395 = vlaneseq
        %v396 = vshrl.u32 %v395, 7
        %v397 = vsub.s32 4, %v396
        %v398 = vrot.slane %v281, %v397
        %v401 = vlaneseq
        %v402 = vshrl.u32 %v401, 7
        %v403 = vsub.s32 0, %v402
        %v404 = vrot.slane %v394, %v403
        %v405 = vlaneseq
        %v406 = vshrl.u32 %v405, 7
        %v407 = vsub.s32 0, %v406
        %v408 = vrot.slane %v398, %v407
        %v409 = vmul.f32 %v388, %v404
        %v410 = vmul.f32 %v388, %v408
        %v411 = vadd.f32 %v384, %v409
        %v412 = vadd.f32 %v385, %v410
        %413 = vset.pattern.permute.xlu0 5
        %414 = vperm.xlu0 %413, %v278
        %v415 = vpop.permute.xlu0 %414
        %v417 = vlaneseq
        %v418 = vshrl.u32 %v417, 7
        %v419 = vsub.s32 1, %v418
        %v420 = vrot.slane %v281, %v419
        %v421 = vlaneseq
        %v422 = vshrl.u32 %v421, 7
        %v423 = vsub.s32 5, %v422
        %v424 = vrot.slane %v281, %v423
        %v427 = vlaneseq
        %v428 = vshrl.u32 %v427, 7
        %v429 = vsub.s32 1, %v428
        %v430 = vrot.slane %v420, %v429
        %v431 = vlaneseq
        %v432 = vshrl.u32 %v431, 7
        %v433 = vsub.s32 1, %v432
        %v434 = vrot.slane %v424, %v433
        %v435 = vmul.f32 %v415, %v430
        %v436 = vmul.f32 %v415, %v434
        %v437 = vadd.f32 %v411, %v435
        %v438 = vadd.f32 %v412, %v436
        %439 = vset.pattern.permute.xlu0 6
        %440 = vperm.xlu0 %439, %v278
        %v441 = vpop.permute.xlu0 %440
        %v443 = vlaneseq
        %v444 = vshrl.u32 %v443, 7
        %v445 = vsub.s32 2, %v444
        %v446 = vrot.slane %v281, %v445
        %v447 = vlaneseq
        %v448 = vshrl.u32 %v447, 7
        %v449 = vsub.s32 6, %v448
        %v450 = vrot.slane %v281, %v449
        %v453 = vlaneseq
        %v454 = vshrl.u32 %v453, 7
        %v455 = vsub.s32 2, %v454
        %v456 = vrot.slane %v446, %v455
        %v457 = vlaneseq
        %v458 = vshrl.u32 %v457, 7
        %v459 = vsub.s32 2, %v458
        %v460 = vrot.slane %v450, %v459
        %v461 = vmul.f32 %v441, %v456
        %v462 = vmul.f32 %v441, %v460
        %v463 = vadd.f32 %v437, %v461
        %v464 = vadd.f32 %v438, %v462
        %465 = vset.pattern.permute.xlu0 7
        %466 = vperm.xlu0 %465, %v278
        %v467 = vpop.permute.xlu0 %466
        %v469 = vlaneseq
        %v470 = vshrl.u32 %v469, 7
        %v471 = vsub.s32 3, %v470
        %v472 = vrot.slane %v281, %v471
        %v473 = vlaneseq
        %v474 = vshrl.u32 %v473, 7
        %v475 = vsub.s32 7, %v474
        %v476 = vrot.slane %v281, %v475
        %v479 = vlaneseq
        %v480 = vshrl.u32 %v479, 7
        %v481 = vsub.s32 3, %v480
        %v482 = vrot.slane %v472, %v481
        %v483 = vlaneseq
        %v484 = vshrl.u32 %v483, 7
        %v485 = vsub.s32 3, %v484
        %v486 = vrot.slane %v476, %v485
        %v487 = vmul.f32 %v467, %v482
        %v488 = vmul.f32 %v467, %v486
        %v489 = vadd.f32 %v463, %v487
        %v490 = vadd.f32 %v464, %v488
        %491 = vset.pattern.permute.xlu0 8
        %492 = vperm.xlu0 %491, %v278
        %v493 = vpop.permute.xlu0 %492
        %v495 = vadd.f32 %v489, %v493
        %v496 = vadd.f32 %v490, %v493
        %v497 = vmax.f32 %v495, 0.0
        %v498 = vmax.f32 %v496, 0.0
        %499 = vset.pattern.permute.xlu0 9
        %500 = vperm.xlu0 %499, %v278
        %v501 = vpop.permute.xlu0 %500
        %v503 = vmul.f32 %v497, %v501
        %v504 = vmul.f32 %v498, %v501
        %v505 = vrot.slane %v503, 4
        %v506 = vadd.f32 %v503, %v505
        %v507 = vrot.slane %v506, 2
        %v508 = vadd.f32 %v506, %v507
        %v509 = vrot.slane %v508, 1
        %v510 = vadd.f32 %v508, %v509
        %v511 = vrot.slane %v504, 4
        %v512 = vadd.f32 %v504, %v511
        %v513 = vrot.slane %v512, 2
        %v514 = vadd.f32 %v512, %v513
        %v515 = vrot.slane %v514, 1
        %v516 = vadd.f32 %v514, %v515
        %v517 = vstv %s279
        %v518 = vadd.f32 %v510, %v517
        %v519 = vadd.f32 %v516, %v517
        %v520 = vxor.u32 %v518, 2147483648
        %v521 = vxor.u32 %v519, 2147483648
        %v522 = vmul.f32 %v520, 1.442695
        %v523 = vpow.pop %v522
        %v524 = vmul.f32 %v521, 1.442695
        %v525 = vpow.pop %v524
        %v526 = vadd.f32 %v523, 1.0
        %v527 = vadd.f32 %v525, 1.0
        %v528 = vrcp.pop %v526
        %v529 = vmul.f32 1.0, %v528
        %v530 = vrcp.pop %v527
        %v531 = vmul.f32 1.0, %v530
        %v534 = vcombine.low %v529, %v531
        %v536 = vmul.f32 %v281, %v534
        %537 = vst [vmem:[%s274] sm:$0xff] %v536
        %s538 = sand.u32 %s145, 1
        %s539 = scalar_lea.sflag [#allocation5], %s538
        %s540 = sand.u32 %s145, 1
        %s541 = smul.addr %s540, 8
        %s542 = scalar_lea.vmem [#allocation8], %s541
        // Predicated region
        $region45: #{tpu_custom_call.1} parent=35 // pred_check
          %p543 = pneg %p155
        $region46: #{tpu_custom_call.1} parent=35 // pred_check_branch
          %545 = sbr.rel (%p543) target = $region48
        $region47: #{tpu_custom_call.1} parent=35 // pred_region
          %s546 = smul.u32 2, %s30
          %s548 = ssub.s32 128, 128
          %549 = vsyncadd %s539, %s548
          %s550 = smul.addr %s29, 2
          %s551 = sadd.s32 %s546, %s550
          %s552 = smul.addr %s551, 64
          %s553 = scalar_lea.hbm %s4, %s552
          %s555 = sshll.u32 %s542, 4
          %s556 = int_to_ptr.vmem [resolvable:$true] %s555
          %558 = dma.vmem_to_hbm [thread:$0]  %s556, 128, %s553, %s539
        $region48: #{tpu_custom_call.1} parent=35 // pred_fallthru
          _
      $region36: #{tpu_custom_call.1} parent=5 // pred_fallthru
        _
      %p559 = scmp.le.s32.totalorder 2, %s20
      // Predicated region
      $region49: #{tpu_custom_call.1} parent=5 // pred_check
        %p560 = pneg %p559
      $region50: #{tpu_custom_call.1} parent=5 // pred_check_branch
        %562 = sbr.rel (%p560) target = $region52
      $region51: #{tpu_custom_call.1} parent=5 // pred_region
        %s563 = ssub.s32 %s20, 2
        // Predicated region
        $region53: #{tpu_custom_call.1} parent=51 // pred_check
          %p564 = pneg %p161
        $region54: #{tpu_custom_call.1} parent=51 // pred_check_branch
          %566 = sbr.rel (%p564) target = $region56
        $region55: #{tpu_custom_call.1} parent=51 // pred_region
          %s567 = sand.u32 %s146, 1
          %s568 = scalar_lea.sflag [#allocation5], %s567
          %s569 = sand.u32 %s146, 1
          %s570 = smul.addr %s569, 8
          %s571 = scalar_lea.vmem [#allocation8], %s570
          %572 = dma.done %s568, 128
        $region56: #{tpu_custom_call.1} parent=51 // pred_fallthru
          _
      $region52: #{tpu_custom_call.1} parent=5 // pred_fallthru
        _
    $region6: #{tpu_custom_call.1} parent=1 // loop_footer
      %s24 = sadd.s32 1, %s20
    $region7: #{tpu_custom_call.1} parent=1 // loop_footer_branch
      %19 = sbr.rel target = $region3
    $region8: #{tpu_custom_call.1} parent=1 // loop_exit
      _
    %573 = vsyncpa [#allocation4], 1
    %s574 = scalar_lea.sflag [#allocation4], 1
    %575 = vsyncpa %s574, 1
    %576 = vsyncpa [#allocation7], 1
    %s577 = scalar_lea.sflag [#allocation7], 1
    %578 = vsyncpa %s577, 1
    %579 = vsyncpa [#allocation5], 1
    %s580 = scalar_lea.sflag [#allocation5], 1
    %581 = vsyncpa %s580, 1

</llo_original>
